<compile_context>
chip_gen: v7x
topology: tpu7x:2x2x1
jax: 0.10.0
libtpu: 0.0.40
codegen_flags: <defaults>
</compile_context>

<pallas_src>
import functools

import jax
import jax.numpy as jnp
from jax.experimental import pallas as pl
from jax.experimental.pallas import tpu as pltpu

LANES = 128
ROW_BLK_MAX = 1024   # rows per tile; sweep 512/1024/2048 (keep <=1024 on v5e)
NUM_SHARDS = 2       # leading parallel grid axis (uses both TCs on v7x)


def _relate_rmse_kernel(p_ref, r_ref, o_ref, *, row_blk, tiles_per_shard,
                        valid_rows, need_mask):
    c = pl.program_id(0)   # shard (parallel)
    t = pl.program_id(1)   # tile within shard (reduction, "arbitrary")

    @pl.when(t == 0)
    def _():
        o_ref[...] = jnp.zeros_like(o_ref)

    p = p_ref[...].astype(jnp.float32)
    r = r_ref[...].astype(jnp.float32)
    val = jnp.abs((p - r) / r)          # == sqrt((p - r)^2 / r^2)

    if need_mask:
        # Rows at/after `valid_rows` are out-of-bounds (unspecified data from a
        # partial last block or a duplicated clamped block) -> contribute 0.
        row_start = (c * tiles_per_shard + t) * row_blk
        row_ids = row_start + jax.lax.broadcasted_iota(jnp.int32, val.shape, 0)
        val = jnp.where(row_ids < valid_rows, val, 0.0)

    # Sublane-group reduction keeps the hot loop on the VPU; the single full
    # cross-lane reduce happens once in the wrapper.
    o_ref[...] += val.reshape(-1, 8, LANES).sum(axis=0)


@jax.jit
def relate_rmse_loss(pred, real):
    assert pred.shape == real.shape, "pred/real must have the same shape"
    n_elems = pred.size

    p_flat = pred.reshape(-1)
    r_flat = real.reshape(-1)

    # Sublane alignment of the (rows, 128) view: 8 rows for 32-bit inputs,
    # 16 for 16-bit, 32 for 8-bit.
    itemsize = jnp.dtype(pred.dtype).itemsize
    sublane_align = max(8, 32 // itemsize)
    chunk = sublane_align * LANES

    # Minimal tail pad only when needed; pad values 1/1 contribute exactly 0
    # to the sum (|1-1|/|1| == 0), so no element-level masking is required.
    pad = (-n_elems) % chunk
    if pad:
        p_flat = jnp.pad(p_flat, (0, pad), constant_values=1)
        r_flat = jnp.pad(r_flat, (0, pad), constant_values=1)

    rows = (n_elems + pad) // LANES
    p2d = p_flat.reshape(rows, LANES)
    r2d = r_flat.reshape(rows, LANES)

    row_blk = min(ROW_BLK_MAX, rows)           # rows is a multiple of 8
    total_tiles = pl.cdiv(rows, row_blk)
    num_shards = NUM_SHARDS if total_tiles >= NUM_SHARDS else 1
    tiles_per_shard = pl.cdiv(total_tiles, num_shards)
    # Masking only needed when some nominal block rows fall outside the array
    # (ragged last tile, or a duplicated trailing tile on the last shard).
    need_mask = (num_shards * tiles_per_shard * row_blk) != rows

    def in_map(c, t):
        k = c * tiles_per_shard + t
        # Clamp so even a fully-redundant trailing tile stays in bounds; its
        # contribution is masked to zero inside the kernel.
        return (jnp.minimum(k, total_tiles - 1), 0)

    kernel = functools.partial(
        _relate_rmse_kernel,
        row_blk=row_blk,
        tiles_per_shard=tiles_per_shard,
        valid_rows=rows,
        need_mask=need_mask,
    )

    partial_sums = pl.pallas_call(
        kernel,
        out_shape=jax.ShapeDtypeStruct((num_shards * 8, LANES), jnp.float32),
        grid=(num_shards, tiles_per_shard),
        in_specs=[
            pl.BlockSpec((row_blk, LANES), in_map),
            pl.BlockSpec((row_blk, LANES), in_map),
        ],
        out_specs=pl.BlockSpec((8, LANES), lambda c, t: (c, 0)),
        compiler_params=pltpu.CompilerParams(
            dimension_semantics=("parallel", "arbitrary"),
        ),
    )(p2d, r2d)

    # Mean over the original (un-padded) element count.
    return jnp.sum(partial_sums) / jnp.float32(n_elems)


def _reference(pred, real):
    return jnp.mean(jnp.sqrt(jnp.square(pred - real) / jnp.square(real)))


if __name__ == "__main__":
    key = jax.random.PRNGKey(0)
    k1, k2 = jax.random.split(key)
    # Small shapes consistent with a regression model's (pred, real) pair.
    shape = (2, 4, 16, 16)
    pred = jax.random.normal(k1, shape, dtype=jnp.float32)
    # Keep `real` away from zero to match a sane relative-error regime.
    real = jax.random.normal(k2, shape, dtype=jnp.float32) + 3.0

    out = relate_rmse_loss(pred, real)
    out = jax.block_until_ready(out)

    ref = _reference(pred, real)
    assert jnp.allclose(out, ref, rtol=1e-4, atol=1e-6), (out, ref)
    print("KERNEL_OK")
</pallas_src>

<mosaic_0001>
module attributes {stable_mosaic.version = 11 : i64} {
  func.func @_relate_rmse_kernel(%arg0: i32, %arg1: i32, %arg2: memref<16x128xf32, #tpu.memory_space<vmem>>, %arg3: memref<16x128xf32, #tpu.memory_space<vmem>>, %arg4: memref<8x128xf32, #tpu.memory_space<vmem>>) attributes {dimension_semantics = [#tpu.dimension_semantics<parallel>, #tpu.dimension_semantics<arbitrary>], iteration_bounds = array<i64: 1, 1>, scalar_prefetch = 0 : i64, scratch_operands = 0 : i64, tpu.core_type = #tpu.core_type<tc>, window_params = [{transform_indices = @transform_0, window_bounds = array<i64: 16, 128>}, {transform_indices = @transform_1, window_bounds = array<i64: 16, 128>}, {transform_indices = @transform_2, window_bounds = array<i64: 8, 128>}]} {
    %c0_i32 = arith.constant 0 : i32
    %0 = arith.cmpi eq, %arg1, %c0_i32 : i32
    %1 = arith.extui %0 : i1 to i32
    %c0_i32_0 = arith.constant 0 : i32
    %2 = arith.cmpi ne, %1, %c0_i32_0 : i32
    scf.if %2 {
      %cst_8 = arith.constant 0.000000e+00 : f32
      %13 = vector.broadcast %cst_8 : f32 to vector<8x128xf32>
      %c0_9 = arith.constant 0 : index
      %c0_10 = arith.constant 0 : index
      %14 = vector.load %arg4[%c0_9, %c0_10] : memref<8x128xf32, #tpu.memory_space<vmem>>, vector<8x128xf32>
      tpu.vector_store %arg4[%c0_9, %c0_10], %13 {strides = array<i32>} : memref<8x128xf32, #tpu.memory_space<vmem>>, vector<8x128xf32>,
    } else {
    }
    %c0 = arith.constant 0 : index
    %c0_1 = arith.constant 0 : index
    %3 = vector.load %arg2[%c0, %c0_1] : memref<16x128xf32, #tpu.memory_space<vmem>>, vector<16x128xf32>
    %c0_2 = arith.constant 0 : index
    %c0_3 = arith.constant 0 : index
    %4 = vector.load %arg3[%c0_2, %c0_3] : memref<16x128xf32, #tpu.memory_space<vmem>>, vector<16x128xf32>
    %5 = arith.subf %3, %4 : vector<16x128xf32>
    %6 = arith.divf %5, %4 : vector<16x128xf32>
    %7 = math.absf %6 : vector<16x128xf32>
    %c0_4 = arith.constant 0 : index
    %c0_5 = arith.constant 0 : index
    %8 = vector.load %arg4[%c0_4, %c0_5] : memref<8x128xf32, #tpu.memory_space<vmem>>, vector<8x128xf32>
    %9 = vector.shape_cast %7 : vector<16x128xf32> to vector<2x8x128xf32>
    %cst = arith.constant dense<0.000000e+00> : vector<8x128xf32>
    %10 = vector.multi_reduction <add>, %9, %cst [0] : vector<2x8x128xf32> to vector<8x128xf32>
    %11 = arith.addf %8, %10 : vector<8x128xf32>
    %c0_6 = arith.constant 0 : index
    %c0_7 = arith.constant 0 : index
    %12 = vector.load %arg4[%c0_6, %c0_7] : memref<8x128xf32, #tpu.memory_space<vmem>>, vector<8x128xf32>
    tpu.vector_store %arg4[%c0_6, %c0_7], %11 {strides = array<i32>} : memref<8x128xf32, #tpu.memory_space<vmem>>, vector<8x128xf32>,
    return
  }
  func.func @transform_0(%arg0: i32, %arg1: i32) -> (i32, i32) {
    %c1_i32 = arith.constant 1 : i32
    %0 = arith.muli %arg0, %c1_i32 : i32
    %1 = arith.addi %0, %arg1 : i32
    %c0_i32 = arith.constant 0 : i32
    %2 = arith.minsi %1, %c0_i32 : i32
    %c0_i32_0 = arith.constant 0 : i32
    %c0_i32_1 = arith.constant 0 : i32
    return %2, %c0_i32_0 : i32, i32
  }
  func.func @transform_1(%arg0: i32, %arg1: i32) -> (i32, i32) {
    %c1_i32 = arith.constant 1 : i32
    %0 = arith.muli %arg0, %c1_i32 : i32
    %1 = arith.addi %0, %arg1 : i32
    %c0_i32 = arith.constant 0 : i32
    %2 = arith.minsi %1, %c0_i32 : i32
    %c0_i32_0 = arith.constant 0 : i32
    %c0_i32_1 = arith.constant 0 : i32
    return %2, %c0_i32_0 : i32, i32
  }
  func.func @transform_2(%arg0: i32, %arg1: i32) -> (i32, i32) {
    %c0_i32 = arith.constant 0 : i32
    %c0_i32_0 = arith.constant 0 : i32
    return %arg0, %c0_i32 : i32, i32
  }
}

</mosaic_0001>

<llo_original>
// kernel: relate_rmse_loss.1
$region0: #{relate_rmse_loss.1}
  #allocation0 [shape = 'u32[]', space=smem, size = 0x4, offset = 0x4, fixed_abs, tag = 'smem constant byte address 0x4 - core index']
  #allocation1 [shape = 'u32[144,128]{1,0:T(1,128)}', space=vmem, size = 0x12000, scoped, tag = 'internal scratch']
  %s0 = inlined_call_operand.vmem [shape: f32[16,128], index: 0, kind: input, shape index: {}]
  %s1 = inlined_call_operand.vmem [shape: f32[16,128], index: 1, kind: input, shape index: {}]
  %s2 = inlined_call_operand.vmem [shape: f32[8,128], index: 2, kind: output, shape index: {}]
  %s3 = sld [smem:[#allocation0]]
  $region22: #{relate_rmse_loss.1} parent=0
    _
  %s5 = ssub.s32 1, %s3
  %s6 = scalar_select 0, %s5, %s3
  // Predicated region
  $region2: #{relate_rmse_loss.1} parent=0 // pred_check
    _
  $region3: #{relate_rmse_loss.1} parent=0 // pred_check_branch
    %8 = sbr.rel (0) target = $region5
  $region4: #{relate_rmse_loss.1} parent=0 // pred_region
    %s9 = sadd.s32 0, 0
    %p10 = scmp.lt.s32.totalorder %s9, 0
    %s11 = scalar_select %p10, %s9, 0
    %s12 = smul.u32 2, %s11
    %p13 = scmp.lt.s32.totalorder %s12, 1
    %s14 = scalar_select %p13, %s12, 1
    %s15 = smul.addr %s14, 8
    %s16 = scalar_lea.vmem %s0, %s15
    %s17 = sadd.s32 0, 0
    %p18 = scmp.lt.s32.totalorder %s17, 0
    %s19 = scalar_select %p18, %s17, 0
    %s20 = smul.u32 2, %s19
  $region5: #{relate_rmse_loss.1} parent=0 // pred_fallthru
    _
  // Predicated region
  $region6: #{relate_rmse_loss.1} parent=0 // pred_check
    _
  $region7: #{relate_rmse_loss.1} parent=0 // pred_check_branch
    %22 = sbr.rel (0) target = $region9
  $region8: #{relate_rmse_loss.1} parent=0 // pred_region
    %s23 = sadd.s32 0, 0
    %p24 = scmp.lt.s32.totalorder %s23, 0
    %s25 = scalar_select %p24, %s23, 0
    %s26 = smul.u32 2, %s25
    %p27 = scmp.lt.s32.totalorder %s26, 1
    %s28 = scalar_select %p27, %s26, 1
    %s29 = smul.addr %s28, 8
    %s30 = scalar_lea.vmem %s1, %s29
    %s31 = sadd.s32 0, 0
    %p32 = scmp.lt.s32.totalorder %s31, 0
    %s33 = scalar_select %p32, %s31, 0
    %s34 = smul.u32 2, %s33
  $region9: #{relate_rmse_loss.1} parent=0 // pred_fallthru
    _
  %s35 = sadd.s32 0, 0
  %p36 = scmp.lt.s32.totalorder %s35, 0
  %s37 = scalar_select %p36, %s35, 0
  %s38 = smul.u32 2, %s37
  %p39 = scmp.lt.s32.totalorder %s38, 1
  %s40 = scalar_select %p39, %s38, 1
  %s41 = smul.addr %s40, 8
  %s42 = scalar_lea.vmem %s0, %s41
  %s43 = sadd.s32 0, 0
  %p44 = scmp.lt.s32.totalorder %s43, 0
  %s45 = scalar_select %p44, %s43, 0
  %s46 = smul.u32 2, %s45
  %p47 = scmp.lt.s32.totalorder %s46, 1
  %s48 = scalar_select %p47, %s46, 1
  %s49 = smul.addr %s48, 8
  %s50 = scalar_lea.vmem %s1, %s49
  %s51 = sadd.s32 0, 0
  %p52 = scmp.lt.s32.totalorder %s51, 0
  %s53 = scalar_select %p52, %s51, 0
  %s54 = smul.u32 2, %s53
  %p55 = scmp.lt.s32.totalorder %s54, 1
  %s56 = scalar_select %p55, %s54, 1
  %s57 = smul.addr %s56, 8
  %s58 = scalar_lea.vmem %s0, %s57
  %s59 = sadd.s32 0, 0
  %p60 = scmp.lt.s32.totalorder %s59, 0
  %s61 = scalar_select %p60, %s59, 0
  %s62 = smul.u32 2, %s61
  %s63 = sadd.s32 0, 0
  %p64 = scmp.lt.s32.totalorder %s63, 0
  %s65 = scalar_select %p64, %s63, 0
  %s66 = smul.u32 2, %s65
  %p67 = scmp.lt.s32.totalorder %s66, 1
  %s68 = scalar_select %p67, %s66, 1
  %s69 = smul.addr %s68, 8
  %s70 = scalar_lea.vmem %s1, %s69
  %s71 = sadd.s32 0, 0
  %p72 = scmp.lt.s32.totalorder %s71, 0
  %s73 = scalar_select %p72, %s71, 0
  %s74 = smul.u32 2, %s73
  %p75 = scmp.eq.s32.totalorder 0, 0
  // Predicated region
  $region10: #{relate_rmse_loss.1} parent=0 // pred_check
    %p76 = pneg %p75
  $region11: #{relate_rmse_loss.1} parent=0 // pred_check_branch
    %78 = sbr.rel (%p76) target = $region13
  $region12: #{relate_rmse_loss.1} parent=0 // pred_region
    %79 = vst [vmem:[%s2] sm:$0xff] 0.0
  $region13: #{relate_rmse_loss.1} parent=0 // pred_fallthru
    _
  %v80 = vld [vmem:[%s58] sm:$0xff]
  %v81 = vld [vmem:[%s58 + $0x8] sm:$0xff]
  %v82 = vld [vmem:[%s70] sm:$0xff]
  %v83 = vld [vmem:[%s70 + $0x8] sm:$0xff]
  %v84 = vsub.f32 %v80, %v82
  %v85 = vsub.f32 %v81, %v83
  %v86 = vrcp.pop %v82
  %v87 = vmul.f32 %v84, %v86
  %v88 = vrcp.pop %v83
  %v89 = vmul.f32 %v85, %v88
  %v90 = vand.u32 2147483647, %v87
  %v91 = vand.u32 2147483647, %v89
  %v92 = vld [vmem:[%s2] sm:$0xff]
  %v93 = vadd.f32 %v90, %v91
  %v94 = vadd.f32 %v92, %v93
  %95 = vst [vmem:[%s2] sm:$0xff] %v94
  // Predicated region
  $region14: #{relate_rmse_loss.1} parent=0 // pred_check
    _
  $region15: #{relate_rmse_loss.1} parent=0 // pred_check_branch
    %97 = sbr.rel (0) target = $region17
  $region16: #{relate_rmse_loss.1} parent=0 // pred_region
    _
  $region17: #{relate_rmse_loss.1} parent=0 // pred_fallthru
    _
  // Predicated region
  $region18: #{relate_rmse_loss.1} parent=0 // pred_check
    _
  $region19: #{relate_rmse_loss.1} parent=0 // pred_check_branch
    %99 = sbr.rel (0) target = $region21
  $region20: #{relate_rmse_loss.1} parent=0 // pred_region
    _
  $region21: #{relate_rmse_loss.1} parent=0 // pred_fallthru
    _

</llo_original>
